<compile_context>
chip_gen: v7x
topology: tpu7x:2x2x1
jax: 0.10.0
libtpu: 0.0.40
codegen_flags: <defaults>
</compile_context>

<pallas_src>
import functools

import jax
import jax.numpy as jnp
from jax.experimental import pallas as pl
from jax.experimental.pallas import tpu as pltpu


def _round_up(x, m):
    return ((x + m - 1) // m) * m


# ----------------------------------------------------------------------------
# Kernel: fused multi-layer MLP, activation resident in VMEM/vregs.
# ----------------------------------------------------------------------------
def _mlp_fused_kernel(x_ref, *rest, relu_flags):
    """h = x; for each layer l: h = [ReLU](h @ W_l + b_l); o = h.

    x_ref:    (TILE_M, K0_pad)  bf16 activation tile
    rest:     w_0, b_0, w_1, b_1, ..., w_{L-1}, b_{L-1}, o_ref
              w_l: (K_l_pad, N_l_pad) bf16;  b_l: (1, N_l_pad) bf16
    o_ref:    (TILE_M, Nout_pad) f32 output tile (padded; wrapper slices it)
    """
    n_layers = len(relu_flags)
    o_ref = rest[-1]
    wb_refs = rest[:-1]

    h = x_ref[...]                                   # bf16 feeds the MXU
    for l, relu in enumerate(relu_flags):            # static unrolled layer loop
        w_ref = wb_refs[2 * l]
        b_ref = wb_refs[2 * l + 1]
        # bf16 x bf16 matmul, f32 accumulation on the MXU.
        acc = jnp.dot(h, w_ref[...], preferred_element_type=jnp.float32)
        # Cheap VPU ops (bias add, ReLU) in f32 — filler under MXU slack,
        # and avoids bf16-VPU upconvert on v5e.
        acc = acc + b_ref[...].astype(jnp.float32)
        if relu:
            acc = jnp.maximum(acc, 0.0)
        # Dropout: identity in eval mode (nothing to do).
        if l < n_layers - 1:
            h = acc.astype(jnp.bfloat16)             # recast only for next dot
        else:
            o_ref[...] = acc.astype(o_ref.dtype)


# ----------------------------------------------------------------------------
# Host-side parameter construction (PyTorch-like init + BN fold).
# ----------------------------------------------------------------------------
def init_fc_network_params(key, input_size, hidden_sizes, output_size,
                           bn_eps=1e-5):
    """Per-layer logical f32 params with BatchNorm folded into the Linear.

    Returns list of dicts: w (K,N) [x @ W layout], b (1,N), relu (bool).
    """
    params = []
    prev = input_size
    sizes = list(hidden_sizes) + [output_size]
    for idx, size in enumerate(sizes):
        key, kw, kb = jax.random.split(key, 3)
        bound = 1.0 / jnp.sqrt(jnp.float32(prev))
        # PyTorch Linear: weight (out, in) ~ U(-bound, bound); store as (in, out).
        w = jax.random.uniform(kw, (prev, size), jnp.float32, -bound, bound)
        b = jax.random.uniform(kb, (1, size), jnp.float32, -bound, bound)
        is_hidden = idx < len(hidden_sizes)
        if is_hidden:
            # Fresh BatchNorm1d in eval: gamma=1, beta=0, mean=0, var=1.
            gamma = jnp.ones((1, size), jnp.float32)
            beta = jnp.zeros((1, size), jnp.float32)
            running_mean = jnp.zeros((1, size), jnp.float32)
            running_var = jnp.ones((1, size), jnp.float32)
            inv_std = 1.0 / jnp.sqrt(running_var + bn_eps)
            scale = gamma * inv_std
            shift = beta - running_mean * scale
            # Fold BN into the Linear: y = (xW + b)*scale + shift = xW' + b'.
            w = w * scale
            b = b * scale + shift
        params.append(dict(w=w, b=b, relu=is_hidden))
        prev = size
    return params


def pad_params_bf16(layer_params):
    """Zero-pad each layer to its OWN (round_up(K,128), round_up(N,128)) in bf16."""
    padded = []
    for p in layer_params:
        K, N = p["w"].shape
        Kp, Np = _round_up(K, 128), _round_up(N, 128)
        w = jnp.zeros((Kp, Np), jnp.bfloat16).at[:K, :N].set(
            p["w"].astype(jnp.bfloat16))
        b = jnp.zeros((1, Np), jnp.bfloat16).at[:, :N].set(
            p["b"].astype(jnp.bfloat16))
        padded.append((w, b))
    relu_flags = tuple(bool(p["relu"]) for p in layer_params)
    return padded, relu_flags


# ----------------------------------------------------------------------------
# Wrapper: one pallas_call for the whole network.
# ----------------------------------------------------------------------------
def fc_network_forward(x, padded_params, relu_flags, *, output_size,
                       tile_m=256):
    """x: (M, K) float32 -> (M, output_size) float32."""
    M, K = x.shape
    K0_pad = padded_params[0][0].shape[0]
    Nout_pad = padded_params[-1][0].shape[1]

    # MXU-aligned M tile (multiple of 128); don't overshoot the padded batch.
    tile_m = max(128, _round_up(min(tile_m, _round_up(M, 128)), 128))
    M_pad = _round_up(M, tile_m)

    # Zero-pad the activation into the first layer's padded width, in bf16.
    x_p = jnp.zeros((M_pad, K0_pad), jnp.bfloat16).at[:M, :K].set(
        x.astype(jnp.bfloat16))

    # BlockSpecs: activation streams over M; weights/biases are constant blocks
    # held in a SINGLE VMEM buffer (no double-buffering of identical data).
    in_specs = [pl.BlockSpec((tile_m, K0_pad), lambda i: (i, 0))]
    flat_args = [x_p]
    weight_bytes = 0
    flops = 0
    for (w, b) in padded_params:
        Kp, Np = w.shape
        in_specs.append(pl.BlockSpec((Kp, Np), lambda i: (0, 0),
                                     pipeline_mode=pl.Buffered(1)))
        in_specs.append(pl.BlockSpec((1, Np), lambda i: (0, 0),
                                     pipeline_mode=pl.Buffered(1)))
        flat_args.append(w)
        flat_args.append(b)
        weight_bytes += w.size * 2 + b.size * 2
        flops += 2 * M_pad * Kp * Np

    in_bytes = x_p.size * 2
    out_bytes = M_pad * Nout_pad * 4

    # VMEM budget: single-buffered weights + double-buffered act/out tiles,
    # with headroom; capped well under v7x's 64 MiB physical per-core VMEM.
    vmem_needed = (weight_bytes
                   + 2 * tile_m * K0_pad * 2
                   + 2 * tile_m * Nout_pad * 4)
    vmem_limit = min(48 * 1024 * 1024,
                     max(16 * 1024 * 1024, 2 * vmem_needed + (8 << 20)))

    kernel = functools.partial(_mlp_fused_kernel, relu_flags=relu_flags)
    out_p = pl.pallas_call(
        kernel,
        out_shape=jax.ShapeDtypeStruct((M_pad, Nout_pad), jnp.float32),
        grid=(M_pad // tile_m,),
        in_specs=in_specs,
        out_specs=pl.BlockSpec((tile_m, Nout_pad), lambda i: (i, 0)),
        compiler_params=pltpu.CompilerParams(
            # M tiles are independent -> shard across TCs when M_pad >= 2*tile_m.
            dimension_semantics=("parallel",),
            vmem_limit_bytes=int(vmem_limit),
        ),
        cost_estimate=pl.CostEstimate(
            flops=int(flops),
            transcendentals=0,
            bytes_accessed=int(weight_bytes + in_bytes + out_bytes),
        ),
    )(*flat_args)

    return out_p[:M, :output_size]


# ----------------------------------------------------------------------------
# References for correctness checking.
# ----------------------------------------------------------------------------
def fc_network_reference_f32(x, layer_params):
    """Module semantics in full f32 (loose check)."""
    h = x
    for p in layer_params:
        h = h @ p["w"] + p["b"]
        if p["relu"]:
            h = jnp.maximum(h, 0.0)
    return h


def fc_network_reference_bf16(x, layer_params):
    """Mimics the kernel's bf16-weight / f32-accumulate math (tight check)."""
    h = x.astype(jnp.bfloat16)
    n = len(layer_params)
    for l, p in enumerate(layer_params):
        acc = jnp.dot(h, p["w"].astype(jnp.bfloat16),
                      preferred_element_type=jnp.float32)
        acc = acc + p["b"].astype(jnp.bfloat16).astype(jnp.float32)
        if p["relu"]:
            acc = jnp.maximum(acc, 0.0)
        h = acc.astype(jnp.bfloat16) if l < n - 1 else acc
    return h


if __name__ == "__main__":
    # Small shapes consistent with the module: batch=8, input=32,
    # hidden_sizes=[64, 64], output=16.
    batch, input_size = 8, 32
    hidden_sizes = [64, 64]
    output_size = 16

    key = jax.random.PRNGKey(0)
    key, kx = jax.random.split(key)
    x = jax.random.normal(kx, (batch, input_size), jnp.float32)

    layer_params = init_fc_network_params(key, input_size, hidden_sizes,
                                          output_size)
    padded_params, relu_flags = pad_params_bf16(layer_params)

    out = fc_network_forward(x, padded_params, relu_flags,
                             output_size=output_size)
    out = jax.block_until_ready(out)

    assert out.shape == (batch, output_size)
    assert out.dtype == jnp.float32
    assert bool(jnp.all(jnp.isfinite(out)))

    # Tight check vs. a reference that mimics the kernel's bf16/f32 math.
    ref_bf16 = fc_network_reference_bf16(x, layer_params)
    assert bool(jnp.allclose(out, ref_bf16, atol=2e-3, rtol=2e-3)), (
        float(jnp.max(jnp.abs(out - ref_bf16))))

    # Loose semantic check vs. the full-f32 eval-mode module forward.
    ref_f32 = fc_network_reference_f32(x, layer_params)
    assert bool(jnp.allclose(out, ref_f32, atol=5e-2, rtol=5e-2)), (
        float(jnp.max(jnp.abs(out - ref_f32))))

    print("KERNEL_OK")
</pallas_src>

<mosaic_0001>
module attributes {stable_mosaic.version = 11 : i64} {
  func.func @_mlp_fused_kernel(%arg0: i32, %arg1: memref<128x128xbf16, #tpu.memory_space<vmem>>, %arg2: memref<128x128xbf16, #tpu.memory_space<vmem>>, %arg3: memref<1x128xbf16, #tpu.memory_space<vmem>>, %arg4: memref<128x128xbf16, #tpu.memory_space<vmem>>, %arg5: memref<1x128xbf16, #tpu.memory_space<vmem>>, %arg6: memref<128x128xbf16, #tpu.memory_space<vmem>>, %arg7: memref<1x128xbf16, #tpu.memory_space<vmem>>, %arg8: memref<128x128xf32, #tpu.memory_space<vmem>>) attributes {dimension_semantics = [#tpu.dimension_semantics<parallel>], iteration_bounds = array<i64: 1>, scalar_prefetch = 0 : i64, scratch_operands = 0 : i64, tpu.core_type = #tpu.core_type<tc>, window_params = [{transform_indices = @transform_0, window_bounds = array<i64: 128, 128>}, {pipeline_mode = #tpu.pipeline_mode<synchronous>, transform_indices = @transform_1, window_bounds = array<i64: 128, 128>}, {pipeline_mode = #tpu.pipeline_mode<synchronous>, transform_indices = @transform_2, window_bounds = array<i64: 1, 128>}, {pipeline_mode = #tpu.pipeline_mode<synchronous>, transform_indices = @transform_3, window_bounds = array<i64: 128, 128>}, {pipeline_mode = #tpu.pipeline_mode<synchronous>, transform_indices = @transform_4, window_bounds = array<i64: 1, 128>}, {pipeline_mode = #tpu.pipeline_mode<synchronous>, transform_indices = @transform_5, window_bounds = array<i64: 128, 128>}, {pipeline_mode = #tpu.pipeline_mode<synchronous>, transform_indices = @transform_6, window_bounds = array<i64: 1, 128>}, {transform_indices = @transform_7, window_bounds = array<i64: 128, 128>}]} {
    %c0 = arith.constant 0 : index
    %c0_0 = arith.constant 0 : index
    %0 = vector.load %arg1[%c0, %c0_0] : memref<128x128xbf16, #tpu.memory_space<vmem>>, vector<128x128xbf16>
    %c0_1 = arith.constant 0 : index
    %c0_2 = arith.constant 0 : index
    %1 = vector.load %arg2[%c0_1, %c0_2] : memref<128x128xbf16, #tpu.memory_space<vmem>>, vector<128x128xbf16>
    %cst = arith.constant dense<0.000000e+00> : vector<128x128xf32>
    %2 = tpu.matmul %0, %1, %cst {dimension_numbers = #tpu.dot_dimension_numbers<[1], [0], [0], [1], [0, 0, 1, 1], [], []>} : vector<128x128xbf16>, vector<128x128xbf16>, vector<128x128xf32> -> vector<128x128xf32>
    %c0_3 = arith.constant 0 : index
    %c0_4 = arith.constant 0 : index
    %3 = vector.load %arg3[%c0_3, %c0_4] : memref<1x128xbf16, #tpu.memory_space<vmem>>, vector<1x128xbf16>
    %4 = arith.extf %3 : vector<1x128xbf16> to vector<1x128xf32>
    %5 = vector.broadcast %4 : vector<1x128xf32> to vector<128x128xf32>
    %6 = arith.addf %2, %5 : vector<128x128xf32>
    %cst_5 = arith.constant 0.000000e+00 : f32
    %7 = vector.broadcast %cst_5 : f32 to vector<128x128xf32>
    %8 = arith.maximumf %6, %7 : vector<128x128xf32>
    %9 = arith.truncf %8 : vector<128x128xf32> to vector<128x128xbf16>
    %c0_6 = arith.constant 0 : index
    %c0_7 = arith.constant 0 : index
    %10 = vector.load %arg4[%c0_6, %c0_7] : memref<128x128xbf16, #tpu.memory_space<vmem>>, vector<128x128xbf16>
    %cst_8 = arith.constant dense<0.000000e+00> : vector<128x128xf32>
    %11 = tpu.matmul %9, %10, %cst_8 {dimension_numbers = #tpu.dot_dimension_numbers<[1], [0], [0], [1], [0, 0, 1, 1], [], []>} : vector<128x128xbf16>, vector<128x128xbf16>, vector<128x128xf32> -> vector<128x128xf32>
    %c0_9 = arith.constant 0 : index
    %c0_10 = arith.constant 0 : index
    %12 = vector.load %arg5[%c0_9, %c0_10] : memref<1x128xbf16, #tpu.memory_space<vmem>>, vector<1x128xbf16>
    %13 = arith.extf %12 : vector<1x128xbf16> to vector<1x128xf32>
    %14 = vector.broadcast %13 : vector<1x128xf32> to vector<128x128xf32>
    %15 = arith.addf %11, %14 : vector<128x128xf32>
    %cst_11 = arith.constant 0.000000e+00 : f32
    %16 = vector.broadcast %cst_11 : f32 to vector<128x128xf32>
    %17 = arith.maximumf %15, %16 : vector<128x128xf32>
    %18 = arith.truncf %17 : vector<128x128xf32> to vector<128x128xbf16>
    %c0_12 = arith.constant 0 : index
    %c0_13 = arith.constant 0 : index
    %19 = vector.load %arg6[%c0_12, %c0_13] : memref<128x128xbf16, #tpu.memory_space<vmem>>, vector<128x128xbf16>
    %cst_14 = arith.constant dense<0.000000e+00> : vector<128x128xf32>
    %20 = tpu.matmul %18, %19, %cst_14 {dimension_numbers = #tpu.dot_dimension_numbers<[1], [0], [0], [1], [0, 0, 1, 1], [], []>} : vector<128x128xbf16>, vector<128x128xbf16>, vector<128x128xf32> -> vector<128x128xf32>
    %c0_15 = arith.constant 0 : index
    %c0_16 = arith.constant 0 : index
    %21 = vector.load %arg7[%c0_15, %c0_16] : memref<1x128xbf16, #tpu.memory_space<vmem>>, vector<1x128xbf16>
    %22 = arith.extf %21 : vector<1x128xbf16> to vector<1x128xf32>
    %23 = vector.broadcast %22 : vector<1x128xf32> to vector<128x128xf32>
    %24 = arith.addf %20, %23 : vector<128x128xf32>
    %c0_17 = arith.constant 0 : index
    %c0_18 = arith.constant 0 : index
    %25 = vector.load %arg8[%c0_17, %c0_18] : memref<128x128xf32, #tpu.memory_space<vmem>>, vector<128x128xf32>
    tpu.vector_store %arg8[%c0_17, %c0_18], %24 {strides = array<i32>} : memref<128x128xf32, #tpu.memory_space<vmem>>, vector<128x128xf32>,
    return
  }
  func.func @transform_0(%arg0: i32) -> (i32, i32) {
    %c0_i32 = arith.constant 0 : i32
    %c0_i32_0 = arith.constant 0 : i32
    return %arg0, %c0_i32 : i32, i32
  }
  func.func @transform_1(%arg0: i32) -> (i32, i32) {
    %c0_i32 = arith.constant 0 : i32
    %c0_i32_0 = arith.constant 0 : i32
    %c0_i32_1 = arith.constant 0 : i32
    return %c0_i32, %c0_i32_0 : i32, i32
  }
  func.func @transform_2(%arg0: i32) -> (i32, i32) {
    %c0_i32 = arith.constant 0 : i32
    %c0_i32_0 = arith.constant 0 : i32
    %c0_i32_1 = arith.constant 0 : i32
    return %c0_i32, %c0_i32_0 : i32, i32
  }
  func.func @transform_3(%arg0: i32) -> (i32, i32) {
    %c0_i32 = arith.constant 0 : i32
    %c0_i32_0 = arith.constant 0 : i32
    %c0_i32_1 = arith.constant 0 : i32
    return %c0_i32, %c0_i32_0 : i32, i32
  }
  func.func @transform_4(%arg0: i32) -> (i32, i32) {
    %c0_i32 = arith.constant 0 : i32
    %c0_i32_0 = arith.constant 0 : i32
    %c0_i32_1 = arith.constant 0 : i32
    return %c0_i32, %c0_i32_0 : i32, i32
  }
  func.func @transform_5(%arg0: i32) -> (i32, i32) {
    %c0_i32 = arith.constant 0 : i32
    %c0_i32_0 = arith.constant 0 : i32
    %c0_i32_1 = arith.constant 0 : i32
    return %c0_i32, %c0_i32_0 : i32, i32
  }
  func.func @transform_6(%arg0: i32) -> (i32, i32) {
    %c0_i32 = arith.constant 0 : i32
    %c0_i32_0 = arith.constant 0 : i32
    %c0_i32_1 = arith.constant 0 : i32
    return %c0_i32, %c0_i32_0 : i32, i32
  }
  func.func @transform_7(%arg0: i32) -> (i32, i32) {
    %c0_i32 = arith.constant 0 : i32
    %c0_i32_0 = arith.constant 0 : i32
    return %arg0, %c0_i32 : i32, i32
  }
}

</mosaic_0001>

<llo_original>
// kernel: tpu_custom_call.1
$region0: #{tpu_custom_call.1}
  #allocation0 [shape = 'u32[]', space=smem, size = 0x4, offset = 0x4, fixed_abs, tag = 'smem constant byte address 0x4 - core index']
  #allocation1 [shape = 'u32[144,128]{1,0:T(1,128)}', space=vmem, size = 0x12000, scoped, tag = 'internal scratch']
  %s0 = inlined_call_operand.hbm [shape: bf16[128,128], index: 0, kind: input, shape index: {}]
  %s1 = inlined_call_operand.hbm [shape: bf16[128,128], index: 1, kind: input, shape index: {}]
  %s2 = inlined_call_operand.vmem [shape: bf16[1,128], index: 2, kind: input, shape index: {}]
  %s3 = inlined_call_operand.hbm [shape: bf16[128,128], index: 3, kind: input, shape index: {}]
  %s4 = inlined_call_operand.vmem [shape: bf16[1,128], index: 4, kind: input, shape index: {}]
  %s5 = inlined_call_operand.hbm [shape: bf16[128,128], index: 5, kind: input, shape index: {}]
  %s6 = inlined_call_operand.vmem [shape: bf16[1,128], index: 6, kind: input, shape index: {}]
  %s7 = inlined_call_operand.hbm [shape: f32[128,128], index: 7, kind: output, shape index: {}]
  %s8 = sld [smem:[#allocation0]]
  $region54: #{tpu_custom_call.1} parent=0
    _
  %s10 = ssub.s32 1, %s8
  %s11 = scalar_select 0, %s10, %s8
  $region1: #{tpu_custom_call.1} parent=0
    #allocation2 [shape = 'u8[32768]{0}', space=vmem, size = 0x8000, scoped, tag = 'input window, operand 0, single buffered']
    #allocation3 [shape = 's32[1]{0}', space=sflag, size = 0x4, scoped, tag = 'scoped memory for tpu_custom_call.1']
    #allocation4 [shape = 's32[1]{0}', space=sflag, size = 0x4, scoped, tag = 'scoped memory for tpu_custom_call.1']
    #allocation5 [shape = 'u8[32768]{0}', space=vmem, size = 0x8000, scoped, tag = 'input window, operand 1, single buffered']
    #allocation6 [shape = 's32[1]{0}', space=sflag, size = 0x4, scoped, tag = 'scoped memory for tpu_custom_call.1']
    #allocation7 [shape = 'u8[32768]{0}', space=vmem, size = 0x8000, scoped, tag = 'input window, operand 3, single buffered']
    #allocation8 [shape = 'u8[32768]{0}', space=vmem, size = 0x8000, scoped, tag = 'input window, operand 5, single buffered']
    #allocation9 [shape = 's32[1]{0}', space=sflag, size = 0x4, scoped, tag = 'scoped memory for tpu_custom_call.1']
    #allocation10 [shape = 'u8[65536]{0}', space=vmem, size = 0x10000, scoped, tag = 'output window, operand 0, single buffered']
    %12 = vsyncpa [#allocation3], 0
    %13 = vsyncpa [#allocation6], 0
    %14 = vsyncpa [#allocation9], 0
    %15 = vsyncpa [#allocation4], 0
    // Predicated region
    $region2: #{tpu_custom_call.1} parent=1 // pred_check
      _
    $region3: #{tpu_custom_call.1} parent=1 // pred_check_branch
      %17 = sbr.rel (0) target = $region5
    $region4: #{tpu_custom_call.1} parent=1 // pred_region
      %s19 = ssub.s32 1024, 1024
      %20 = vsyncadd [#allocation3], %s19
      %s21 = sshll.u32 [#allocation2], 4
      %s22 = int_to_ptr.vmem [resolvable:$true] %s21
      %27 = dma.hbm_to_vmem [thread:$0]  %s0, 1024, %s22, [#allocation3], 64, 64, 4
    $region5: #{tpu_custom_call.1} parent=1 // pred_fallthru
      _
    // Predicated region
    $region6: #{tpu_custom_call.1} parent=1 // pred_check
      _
    $region7: #{tpu_custom_call.1} parent=1 // pred_check_branch
      %29 = sbr.rel (0) target = $region9
    $region8: #{tpu_custom_call.1} parent=1 // pred_region
      %s31 = ssub.s32 1024, 1024
      %32 = vsyncadd [#allocation6], %s31
      %s33 = sshll.u32 [#allocation5], 4
      %s34 = int_to_ptr.vmem [resolvable:$true] %s33
      %39 = dma.hbm_to_vmem [thread:$0]  %s1, 1024, %s34, [#allocation6], 64, 64, 4
    $region9: #{tpu_custom_call.1} parent=1 // pred_fallthru
      _
    // Predicated region
    $region10: #{tpu_custom_call.1} parent=1 // pred_check
      _
    $region11: #{tpu_custom_call.1} parent=1 // pred_check_branch
      %41 = sbr.rel (0) target = $region13
    $region12: #{tpu_custom_call.1} parent=1 // pred_region
      _
    $region13: #{tpu_custom_call.1} parent=1 // pred_fallthru
      _
    // Predicated region
    $region14: #{tpu_custom_call.1} parent=1 // pred_check
      _
    $region15: #{tpu_custom_call.1} parent=1 // pred_check_branch
      %43 = sbr.rel (0) target = $region17
    $region16: #{tpu_custom_call.1} parent=1 // pred_region
      %s45 = ssub.s32 1024, 1024
      %46 = vsyncadd [#allocation6], %s45
      %s47 = sshll.u32 [#allocation7], 4
      %s48 = int_to_ptr.vmem [resolvable:$true] %s47
      %53 = dma.hbm_to_vmem [thread:$0]  %s3, 1024, %s48, [#allocation6], 64, 64, 4
    $region17: #{tpu_custom_call.1} parent=1 // pred_fallthru
      _
    // Predicated region
    $region18: #{tpu_custom_call.1} parent=1 // pred_check
      _
    $region19: #{tpu_custom_call.1} parent=1 // pred_check_branch
      %55 = sbr.rel (0) target = $region21
    $region20: #{tpu_custom_call.1} parent=1 // pred_region
      _
    $region21: #{tpu_custom_call.1} parent=1 // pred_fallthru
      _
    // Predicated region
    $region22: #{tpu_custom_call.1} parent=1 // pred_check
      _
    $region23: #{tpu_custom_call.1} parent=1 // pred_check_branch
      %57 = sbr.rel (0) target = $region25
    $region24: #{tpu_custom_call.1} parent=1 // pred_region
      %s59 = ssub.s32 1024, 1024
      %60 = vsyncadd [#allocation9], %s59
      %s61 = sshll.u32 [#allocation8], 4
      %s62 = int_to_ptr.vmem [resolvable:$true] %s61
      %67 = dma.hbm_to_vmem [thread:$0]  %s5, 1024, %s62, [#allocation9], 64, 64, 4
    $region25: #{tpu_custom_call.1} parent=1 // pred_fallthru
      _
    // Predicated region
    $region26: #{tpu_custom_call.1} parent=1 // pred_check
      _
    $region27: #{tpu_custom_call.1} parent=1 // pred_check_branch
      %69 = sbr.rel (0) target = $region29
    $region28: #{tpu_custom_call.1} parent=1 // pred_region
      _
    $region29: #{tpu_custom_call.1} parent=1 // pred_fallthru
      _
    // Predicated region
    $region30: #{tpu_custom_call.1} parent=1 // pred_check
      _
    $region31: #{tpu_custom_call.1} parent=1 // pred_check_branch
      %71 = sbr.rel (0) target = $region33
    $region32: #{tpu_custom_call.1} parent=1 // pred_region
      %72 = dma.done [#allocation3], 1024
    $region33: #{tpu_custom_call.1} parent=1 // pred_fallthru
      _
    // Predicated region
    $region34: #{tpu_custom_call.1} parent=1 // pred_check
      _
    $region35: #{tpu_custom_call.1} parent=1 // pred_check_branch
      %74 = sbr.rel (0) target = $region37
    $region36: #{tpu_custom_call.1} parent=1 // pred_region
      %75 = dma.done [#allocation6], 1024
    $region37: #{tpu_custom_call.1} parent=1 // pred_fallthru
      _
    // Predicated region
    $region38: #{tpu_custom_call.1} parent=1 // pred_check
      _
    $region39: #{tpu_custom_call.1} parent=1 // pred_check_branch
      %77 = sbr.rel (0) target = $region41
    $region40: #{tpu_custom_call.1} parent=1 // pred_region
      %78 = dma.done [#allocation6], 1024
    $region41: #{tpu_custom_call.1} parent=1 // pred_fallthru
      _
    // Predicated region
    $region42: #{tpu_custom_call.1} parent=1 // pred_check
      _
    $region43: #{tpu_custom_call.1} parent=1 // pred_check_branch
      %80 = sbr.rel (0) target = $region45
    $region44: #{tpu_custom_call.1} parent=1 // pred_region
      %81 = dma.done [#allocation9], 1024
    $region45: #{tpu_custom_call.1} parent=1 // pred_fallthru
      _
    %v83 = vld [vmem:[#allocation2] sm:$0xf]
    %v84 = vld [vmem:[#allocation2 + $0x4] sm:$0xf]
    %v85 = vld [vmem:[#allocation2 + $0x8] sm:$0xf]
    %v86 = vld [vmem:[#allocation2 + $0xc] sm:$0xf]
    %v87 = vld [vmem:[#allocation2 + $0x10] sm:$0xf]
    %v88 = vld [vmem:[#allocation2 + $0x14] sm:$0xf]
    %v89 = vld [vmem:[#allocation2 + $0x18] sm:$0xf]
    %v90 = vld [vmem:[#allocation2 + $0x1c] sm:$0xf]
    %v91 = vld [vmem:[#allocation2 + $0x20] sm:$0xf]
    %v92 = vld [vmem:[#allocation2 + $0x24] sm:$0xf]
    %v93 = vld [vmem:[#allocation2 + $0x28] sm:$0xf]
    %v94 = vld [vmem:[#allocation2 + $0x2c] sm:$0xf]
    %v95 = vld [vmem:[#allocation2 + $0x30] sm:$0xf]
    %v96 = vld [vmem:[#allocation2 + $0x34] sm:$0xf]
    %v97 = vld [vmem:[#allocation2 + $0x38] sm:$0xf]
    %v98 = vld [vmem:[#allocation2 + $0x3c] sm:$0xf]
    %v99 = vld [vmem:[#allocation5] sm:$0xf]
    %v100 = vld [vmem:[#allocation5 + $0x4] sm:$0xf]
    %v101 = vld [vmem:[#allocation5 + $0x8] sm:$0xf]
    %v102 = vld [vmem:[#allocation5 + $0xc] sm:$0xf]
    %v103 = vld [vmem:[#allocation5 + $0x10] sm:$0xf]
    %v104 = vld [vmem:[#allocation5 + $0x14] sm:$0xf]
    %v105 = vld [vmem:[#allocation5 + $0x18] sm:$0xf]
    %v106 = vld [vmem:[#allocation5 + $0x1c] sm:$0xf]
    %v107 = vld [vmem:[#allocation5 + $0x20] sm:$0xf]
    %v108 = vld [vmem:[#allocation5 + $0x24] sm:$0xf]
    %v109 = vld [vmem:[#allocation5 + $0x28] sm:$0xf]
    %v110 = vld [vmem:[#allocation5 + $0x2c] sm:$0xf]
    %v111 = vld [vmem:[#allocation5 + $0x30] sm:$0xf]
    %v112 = vld [vmem:[#allocation5 + $0x34] sm:$0xf]
    %v113 = vld [vmem:[#allocation5 + $0x38] sm:$0xf]
    %v114 = vld [vmem:[#allocation5 + $0x3c] sm:$0xf]
    %v115 = vld [vmem:[%s2] sm:$0x1]
    %v116 = vunpack.c.l.bf16 %v115
    %v117 = vlaneseq
    %v118 = vshrl.u32 %v117, 7
    %v119 = vsub.s32 0, %v118
    %v120 = vrot.slane %v116, %v119
    %v137 = vunpack.c.l.b16 %v83
    %v138 = vunpack.c.l.b16 %v84
    %v139 = vunpack.c.l.b16 %v85
    %v140 = vunpack.c.l.b16 %v86
    %v141 = vunpack.c.l.b16 %v87
    %v142 = vunpack.c.l.b16 %v88
    %v143 = vunpack.c.l.b16 %v89
    %v144 = vunpack.c.l.b16 %v90
    %v145 = vunpack.c.l.b16 %v91
    %v146 = vunpack.c.l.b16 %v92
    %v147 = vunpack.c.l.b16 %v93
    %v148 = vunpack.c.l.b16 %v94
    %v149 = vunpack.c.l.b16 %v95
    %v150 = vunpack.c.l.b16 %v96
    %v151 = vunpack.c.l.b16 %v97
    %v152 = vunpack.c.l.b16 %v98
    %v153 = vpack.c.b16 %v138, %v137
    %v154 = vpack.c.b16 %v140, %v139
    %v155 = vpack.c.b16 %v142, %v141
    %v156 = vpack.c.b16 %v144, %v143
    %v157 = vpack.c.b16 %v146, %v145
    %v158 = vpack.c.b16 %v148, %v147
    %v159 = vpack.c.b16 %v150, %v149
    %v160 = vpack.c.b16 %v152, %v151
    %v185 = vunpack.c.l.b16 %v99
    %v186 = vunpack.c.l.b16 %v100
    %v187 = vunpack.c.l.b16 %v101
    %v188 = vunpack.c.l.b16 %v102
    %v189 = vunpack.c.l.b16 %v103
    %v190 = vunpack.c.l.b16 %v104
    %v191 = vunpack.c.l.b16 %v105
    %v192 = vunpack.c.l.b16 %v106
    %v193 = vunpack.c.l.b16 %v107
    %v194 = vunpack.c.l.b16 %v108
    %v195 = vunpack.c.l.b16 %v109
    %v196 = vunpack.c.l.b16 %v110
    %v197 = vunpack.c.l.b16 %v111
    %v198 = vunpack.c.l.b16 %v112
    %v199 = vunpack.c.l.b16 %v113
    %v200 = vunpack.c.l.b16 %v114
    %v201 = vpack.c.b16 %v186, %v185
    %v202 = vpack.c.b16 %v188, %v187
    %v203 = vpack.c.b16 %v190, %v189
    %v204 = vpack.c.b16 %v192, %v191
    %v205 = vpack.c.b16 %v194, %v193
    %v206 = vpack.c.b16 %v196, %v195
    %v207 = vpack.c.b16 %v198, %v197
    %v208 = vpack.c.b16 %v200, %v199
    %217 = vmatprep.subr.bf16.mxu0 0
    %218 = vmatpush1.bf16.msra.mxu0 %v201
    %219 = vmatprep.subr.bf16.mxu0 0
    %220 = vmatpush1.bf16.msra.mxu0 %v202
    %221 = vmatprep.subr.bf16.mxu0 0
    %222 = vmatpush1.bf16.msra.mxu0 %v203
    %223 = vmatprep.subr.bf16.mxu0 0
    %224 = vmatpush1.bf16.msra.mxu0 %v204
    %225 = vmatprep.subr.bf16.mxu0 0
    %226 = vmatpush1.bf16.msra.mxu0 %v205
    %227 = vmatprep.subr.bf16.mxu0 0
    %228 = vmatpush1.bf16.msra.mxu0 %v206
    %229 = vmatprep.subr.bf16.mxu0 0
    %230 = vmatpush1.bf16.msra.mxu0 %v207
    %231 = vmatprep.subr.bf16.mxu0 0
    %232 = vmatpush1.bf16.msra.mxu0 %v208
    %233 = vmatprep.subr.bf16.mxu0 0
    %234 = vmatpush1.bf16.msra.mxu0 0
    %235 = vmatprep.subr.bf16.mxu0 0
    %236 = vmatpush1.bf16.msra.mxu0 0
    %237 = vmatprep.subr.bf16.mxu0 0
    %238 = vmatpush1.bf16.msra.mxu0 0
    %239 = vmatprep.subr.bf16.mxu0 0
    %240 = vmatpush1.bf16.msra.mxu0 0
    %241 = vmatprep.subr.bf16.mxu0 0
    %242 = vmatpush1.bf16.msra.mxu0 0
    %243 = vmatprep.subr.bf16.mxu0 0
    %244 = vmatpush1.bf16.msra.mxu0 0
    %245 = vmatprep.subr.bf16.mxu0 0
    %246 = vmatpush1.bf16.msra.mxu0 0
    %247 = vmatprep.subr.bf16.mxu0 0
    %248 = vmatpush1.bf16.msra.mxu0 0
    %249 = vmatprep.mubr.bf16.mxu0 0
    %250 = vmatmul.mubr.bf16.gmra.mrb[0].mxu0 %v153
    %v251 = vpop.f32.mrb[0].mxu0
    %v252 = vadd.f32 %v120, %v251
    %v253 = vpop.f32.mrb[0].mxu0
    %v254 = vpop.f32.mrb[0].mxu0
    %v255 = vadd.f32 %v120, %v254
    %v256 = vpop.f32.mrb[0].mxu0
    %257 = vmatprep.mubr.bf16.mxu0 0
    %258 = vmatmul.mubr.bf16.gmra.mrb[0].mxu0 %v154
    %v259 = vpop.f32.mrb[0].mxu0
    %v260 = vadd.f32 %v120, %v259
    %v261 = vpop.f32.mrb[0].mxu0
    %v262 = vpop.f32.mrb[0].mxu0
    %v263 = vadd.f32 %v120, %v262
    %v264 = vpop.f32.mrb[0].mxu0
    %265 = vmatprep.mubr.bf16.mxu0 0
    %266 = vmatmul.mubr.bf16.gmra.mrb[0].mxu0 %v155
    %v267 = vpop.f32.mrb[0].mxu0
    %v268 = vadd.f32 %v120, %v267
    %v269 = vpop.f32.mrb[0].mxu0
    %v270 = vpop.f32.mrb[0].mxu0
    %v271 = vadd.f32 %v120, %v270
    %v272 = vpop.f32.mrb[0].mxu0
    %273 = vmatprep.mubr.bf16.mxu0 0
    %274 = vmatmul.mubr.bf16.gmra.mrb[0].mxu0 %v156
    %v275 = vpop.f32.mrb[0].mxu0
    %v276 = vadd.f32 %v120, %v275
    %v277 = vpop.f32.mrb[0].mxu0
    %v278 = vpop.f32.mrb[0].mxu0
    %v279 = vadd.f32 %v120, %v278
    %v280 = vpop.f32.mrb[0].mxu0
    %281 = vmatprep.mubr.bf16.mxu0 0
    %282 = vmatmul.mubr.bf16.gmra.mrb[0].mxu0 %v157
    %v283 = vpop.f32.mrb[0].mxu0
    %v284 = vadd.f32 %v120, %v283
    %v285 = vpop.f32.mrb[0].mxu0
    %v286 = vpop.f32.mrb[0].mxu0
    %v287 = vadd.f32 %v120, %v286
    %v288 = vpop.f32.mrb[0].mxu0
    %289 = vmatprep.mubr.bf16.mxu0 0
    %290 = vmatmul.mubr.bf16.gmra.mrb[0].mxu0 %v158
    %v291 = vpop.f32.mrb[0].mxu0
    %v292 = vadd.f32 %v120, %v291
    %v293 = vpop.f32.mrb[0].mxu0
    %v294 = vpop.f32.mrb[0].mxu0
    %v295 = vadd.f32 %v120, %v294
    %v296 = vpop.f32.mrb[0].mxu0
    %297 = vmatprep.mubr.bf16.mxu0 0
    %298 = vmatmul.mubr.bf16.gmra.mrb[0].mxu0 %v159
    %v299 = vpop.f32.mrb[0].mxu0
    %v300 = vadd.f32 %v120, %v299
    %v301 = vpop.f32.mrb[0].mxu0
    %v302 = vpop.f32.mrb[0].mxu0
    %v303 = vadd.f32 %v120, %v302
    %v304 = vpop.f32.mrb[0].mxu0
    %305 = vmatprep.mubr.bf16.mxu0 0
    %306 = vmatmul.mubr.bf16.gmra.mrb[0].mxu0 %v160
    %v307 = vpop.f32.mrb[0].mxu0
    %v308 = vadd.f32 %v120, %v307
    %v309 = vpop.f32.mrb[0].mxu0
    %v310 = vpop.f32.mrb[0].mxu0
    %v311 = vadd.f32 %v120, %v310
    %v312 = vpop.f32.mrb[0].mxu0
    %313 = vdwg.mxu0
    %v314 = vmax.f32 %v252, 0.0
    %v315 = vmax.f32 %v255, 0.0
    %v316 = vmax.f32 %v260, 0.0
    %v317 = vmax.f32 %v263, 0.0
    %v318 = vmax.f32 %v268, 0.0
    %v319 = vmax.f32 %v271, 0.0
    %v320 = vmax.f32 %v276, 0.0
    %v321 = vmax.f32 %v279, 0.0
    %v322 = vmax.f32 %v284, 0.0
    %v323 = vmax.f32 %v287, 0.0
    %v324 = vmax.f32 %v292, 0.0
    %v325 = vmax.f32 %v295, 0.0
    %v326 = vmax.f32 %v300, 0.0
    %v327 = vmax.f32 %v303, 0.0
    %v328 = vmax.f32 %v308, 0.0
    %v329 = vmax.f32 %v311, 0.0
    %v330 = vpack.c.bf16 %v315, %v314
    %v331 = vpack.c.bf16 %v317, %v316
    %v332 = vpack.c.bf16 %v319, %v318
    %v333 = vpack.c.bf16 %v321, %v320
    %v334 = vpack.c.bf16 %v323, %v322
    %v335 = vpack.c.bf16 %v325, %v324
    %v336 = vpack.c.bf16 %v327, %v326
    %v337 = vpack.c.bf16 %v329, %v328
    %v338 = vld [vmem:[#allocation7] sm:$0xf]
    %v339 = vld [vmem:[#allocation7 + $0x4] sm:$0xf]
    %v340 = vld [vmem:[#allocation7 + $0x8] sm:$0xf]
    %v341 = vld [vmem:[#allocation7 + $0xc] sm:$0xf]
    %v342 = vld [vmem:[#allocation7 + $0x10] sm:$0xf]
    %v343 = vld [vmem:[#allocation7 + $0x14] sm:$0xf]
    %v344 = vld [vmem:[#allocation7 + $0x18] sm:$0xf]
    %v345 = vld [vmem:[#allocation7 + $0x1c] sm:$0xf]
    %v346 = vld [vmem:[#allocation7 + $0x20] sm:$0xf]
    %v347 = vld [vmem:[#allocation7 + $0x24] sm:$0xf]
    %v348 = vld [vmem:[#allocation7 + $0x28] sm:$0xf]
    %v349 = vld [vmem:[#allocation7 + $0x2c] sm:$0xf]
    %v350 = vld [vmem:[#allocation7 + $0x30] sm:$0xf]
    %v351 = vld [vmem:[#allocation7 + $0x34] sm:$0xf]
    %v352 = vld [vmem:[#allocation7 + $0x38] sm:$0xf]
    %v353 = vld [vmem:[#allocation7 + $0x3c] sm:$0xf]
    %v354 = vld [vmem:[%s4] sm:$0x1]
    %v355 = vunpack.c.l.bf16 %v354
    %v356 = vlaneseq
    %v357 = vshrl.u32 %v356, 7
    %v358 = vsub.s32 0, %v357
    %v359 = vrot.slane %v355, %v358
    %v376 = vunpack.c.l.b16 %v338
    %v377 = vunpack.c.l.b16 %v339
    %v378 = vunpack.c.l.b16 %v340
    %v379 = vunpack.c.l.b16 %v341
    %v380 = vunpack.c.l.b16 %v342
    %v381 = vunpack.c.l.b16 %v343
    %v382 = vunpack.c.l.b16 %v344
    %v383 = vunpack.c.l.b16 %v345
    %v384 = vunpack.c.l.b16 %v346
    %v385 = vunpack.c.l.b16 %v347
    %v386 = vunpack.c.l.b16 %v348
    %v387 = vunpack.c.l.b16 %v349
    %v388 = vunpack.c.l.b16 %v350
    %v389 = vunpack.c.l.b16 %v351
    %v390 = vunpack.c.l.b16 %v352
    %v391 = vunpack.c.l.b16 %v353
    %v392 = vpack.c.b16 %v377, %v376
    %v393 = vpack.c.b16 %v379, %v378
    %v394 = vpack.c.b16 %v381, %v380
    %v395 = vpack.c.b16 %v383, %v382
    %v396 = vpack.c.b16 %v385, %v384
    %v397 = vpack.c.b16 %v387, %v386
    %v398 = vpack.c.b16 %v389, %v388
    %v399 = vpack.c.b16 %v391, %v390
    %408 = vmatprep.subr.bf16.mxu0 0
    %409 = vmatpush1.bf16.msra.mxu0 %v392
    %410 = vmatprep.subr.bf16.mxu0 0
    %411 = vmatpush1.bf16.msra.mxu0 %v393
    %412 = vmatprep.subr.bf16.mxu0 0
    %413 = vmatpush1.bf16.msra.mxu0 %v394
    %414 = vmatprep.subr.bf16.mxu0 0
    %415 = vmatpush1.bf16.msra.mxu0 %v395
    %416 = vmatprep.subr.bf16.mxu0 0
    %417 = vmatpush1.bf16.msra.mxu0 %v396
    %418 = vmatprep.subr.bf16.mxu0 0
    %419 = vmatpush1.bf16.msra.mxu0 %v397
    %420 = vmatprep.subr.bf16.mxu0 0
    %421 = vmatpush1.bf16.msra.mxu0 %v398
    %422 = vmatprep.subr.bf16.mxu0 0
    %423 = vmatpush1.bf16.msra.mxu0 %v399
    %424 = vmatprep.subr.bf16.mxu0 0
    %425 = vmatpush1.bf16.msra.mxu0 0
    %426 = vmatprep.subr.bf16.mxu0 0
    %427 = vmatpush1.bf16.msra.mxu0 0
    %428 = vmatprep.subr.bf16.mxu0 0
    %429 = vmatpush1.bf16.msra.mxu0 0
    %430 = vmatprep.subr.bf16.mxu0 0
    %431 = vmatpush1.bf16.msra.mxu0 0
    %432 = vmatprep.subr.bf16.mxu0 0
    %433 = vmatpush1.bf16.msra.mxu0 0
    %434 = vmatprep.subr.bf16.mxu0 0
    %435 = vmatpush1.bf16.msra.mxu0 0
    %436 = vmatprep.subr.bf16.mxu0 0
    %437 = vmatpush1.bf16.msra.mxu0 0
    %438 = vmatprep.subr.bf16.mxu0 0
    %439 = vmatpush1.bf16.msra.mxu0 0
    %440 = vmatprep.mubr.bf16.mxu0 0
    %441 = vmatmul.mubr.bf16.gmra.mrb[0].mxu0 %v330
    %v442 = vpop.f32.mrb[0].mxu0
    %v443 = vadd.f32 %v359, %v442
    %v444 = vpop.f32.mrb[0].mxu0
    %v445 = vpop.f32.mrb[0].mxu0
    %v446 = vadd.f32 %v359, %v445
    %v447 = vpop.f32.mrb[0].mxu0
    %448 = vmatprep.mubr.bf16.mxu0 0
    %449 = vmatmul.mubr.bf16.gmra.mrb[0].mxu0 %v331
    %v450 = vpop.f32.mrb[0].mxu0
    %v451 = vadd.f32 %v359, %v450
    %v452 = vpop.f32.mrb[0].mxu0
    %v453 = vpop.f32.mrb[0].mxu0
    %v454 = vadd.f32 %v359, %v453
    %v455 = vpop.f32.mrb[0].mxu0
    %456 = vmatprep.mubr.bf16.mxu0 0
    %457 = vmatmul.mubr.bf16.gmra.mrb[0].mxu0 %v332
    %v458 = vpop.f32.mrb[0].mxu0
    %v459 = vadd.f32 %v359, %v458
    %v460 = vpop.f32.mrb[0].mxu0
    %v461 = vpop.f32.mrb[0].mxu0
    %v462 = vadd.f32 %v359, %v461
    %v463 = vpop.f32.mrb[0].mxu0
    %464 = vmatprep.mubr.bf16.mxu0 0
    %465 = vmatmul.mubr.bf16.gmra.mrb[0].mxu0 %v333
    %v466 = vpop.f32.mrb[0].mxu0
    %v467 = vadd.f32 %v359, %v466
    %v468 = vpop.f32.mrb[0].mxu0
    %v469 = vpop.f32.mrb[0].mxu0
    %v470 = vadd.f32 %v359, %v469
    %v471 = vpop.f32.mrb[0].mxu0
    %472 = vmatprep.mubr.bf16.mxu0 0
    %473 = vmatmul.mubr.bf16.gmra.mrb[0].mxu0 %v334
    %v474 = vpop.f32.mrb[0].mxu0
    %v475 = vadd.f32 %v359, %v474
    %v476 = vpop.f32.mrb[0].mxu0
    %v477 = vpop.f32.mrb[0].mxu0
    %v478 = vadd.f32 %v359, %v477
    %v479 = vpop.f32.mrb[0].mxu0
    %480 = vmatprep.mubr.bf16.mxu0 0
    %481 = vmatmul.mubr.bf16.gmra.mrb[0].mxu0 %v335
    %v482 = vpop.f32.mrb[0].mxu0
    %v483 = vadd.f32 %v359, %v482
    %v484 = vpop.f32.mrb[0].mxu0
    %v485 = vpop.f32.mrb[0].mxu0
    %v486 = vadd.f32 %v359, %v485
    %v487 = vpop.f32.mrb[0].mxu0
    %488 = vmatprep.mubr.bf16.mxu0 0
    %489 = vmatmul.mubr.bf16.gmra.mrb[0].mxu0 %v336
    %v490 = vpop.f32.mrb[0].mxu0
    %v491 = vadd.f32 %v359, %v490
    %v492 = vpop.f32.mrb[0].mxu0
    %v493 = vpop.f32.mrb[0].mxu0
    %v494 = vadd.f32 %v359, %v493
    %v495 = vpop.f32.mrb[0].mxu0
    %496 = vmatprep.mubr.bf16.mxu0 0
    %497 = vmatmul.mubr.bf16.gmra.mrb[0].mxu0 %v337
    %v498 = vpop.f32.mrb[0].mxu0
    %v499 = vadd.f32 %v359, %v498
    %v500 = vpop.f32.mrb[0].mxu0
    %v501 = vpop.f32.mrb[0].mxu0
    %v502 = vadd.f32 %v359, %v501
    %v503 = vpop.f32.mrb[0].mxu0
    %504 = vdwg.mxu0
    %v505 = vmax.f32 %v443, 0.0
    %v506 = vmax.f32 %v446, 0.0
    %v507 = vmax.f32 %v451, 0.0
    %v508 = vmax.f32 %v454, 0.0
    %v509 = vmax.f32 %v459, 0.0
    %v510 = vmax.f32 %v462, 0.0
    %v511 = vmax.f32 %v467, 0.0
    %v512 = vmax.f32 %v470, 0.0
    %v513 = vmax.f32 %v475, 0.0
    %v514 = vmax.f32 %v478, 0.0
    %v515 = vmax.f32 %v483, 0.0
    %v516 = vmax.f32 %v486, 0.0
    %v517 = vmax.f32 %v491, 0.0
    %v518 = vmax.f32 %v494, 0.0
    %v519 = vmax.f32 %v499, 0.0
    %v520 = vmax.f32 %v502, 0.0
    %v521 = vpack.c.bf16 %v506, %v505
    %v522 = vpack.c.bf16 %v508, %v507
    %v523 = vpack.c.bf16 %v510, %v509
    %v524 = vpack.c.bf16 %v512, %v511
    %v525 = vpack.c.bf16 %v514, %v513
    %v526 = vpack.c.bf16 %v516, %v515
    %v527 = vpack.c.bf16 %v518, %v517
    %v528 = vpack.c.bf16 %v520, %v519
    %v529 = vld [vmem:[#allocation8] sm:$0xf]
    %v530 = vld [vmem:[#allocation8 + $0x4] sm:$0xf]
    %v531 = vld [vmem:[#allocation8 + $0x8] sm:$0xf]
    %v532 = vld [vmem:[#allocation8 + $0xc] sm:$0xf]
    %v533 = vld [vmem:[#allocation8 + $0x10] sm:$0xf]
    %v534 = vld [vmem:[#allocation8 + $0x14] sm:$0xf]
    %v535 = vld [vmem:[#allocation8 + $0x18] sm:$0xf]
    %v536 = vld [vmem:[#allocation8 + $0x1c] sm:$0xf]
    %v537 = vld [vmem:[#allocation8 + $0x20] sm:$0xf]
    %v538 = vld [vmem:[#allocation8 + $0x24] sm:$0xf]
    %v539 = vld [vmem:[#allocation8 + $0x28] sm:$0xf]
    %v540 = vld [vmem:[#allocation8 + $0x2c] sm:$0xf]
    %v541 = vld [vmem:[#allocation8 + $0x30] sm:$0xf]
    %v542 = vld [vmem:[#allocation8 + $0x34] sm:$0xf]
    %v543 = vld [vmem:[#allocation8 + $0x38] sm:$0xf]
    %v544 = vld [vmem:[#allocation8 + $0x3c] sm:$0xf]
    %v545 = vld [vmem:[%s6] sm:$0x1]
    %v546 = vunpack.c.l.bf16 %v545
    %v547 = vlaneseq
    %v548 = vshrl.u32 %v547, 7
    %v549 = vsub.s32 0, %v548
    %v550 = vrot.slane %v546, %v549
    %v567 = vunpack.c.l.b16 %v529
    %v568 = vunpack.c.l.b16 %v530
    %v569 = vunpack.c.l.b16 %v531
    %v570 = vunpack.c.l.b16 %v532
    %v571 = vunpack.c.l.b16 %v533
    %v572 = vunpack.c.l.b16 %v534
    %v573 = vunpack.c.l.b16 %v535
    %v574 = vunpack.c.l.b16 %v536
    %v575 = vunpack.c.l.b16 %v537
    %v576 = vunpack.c.l.b16 %v538
    %v577 = vunpack.c.l.b16 %v539
    %v578 = vunpack.c.l.b16 %v540
    %v579 = vunpack.c.l.b16 %v541
    %v580 = vunpack.c.l.b16 %v542
    %v581 = vunpack.c.l.b16 %v543
    %v582 = vunpack.c.l.b16 %v544
    %v583 = vpack.c.b16 %v568, %v567
    %v584 = vpack.c.b16 %v570, %v569
    %v585 = vpack.c.b16 %v572, %v571
    %v586 = vpack.c.b16 %v574, %v573
    %v587 = vpack.c.b16 %v576, %v575
    %v588 = vpack.c.b16 %v578, %v577
    %v589 = vpack.c.b16 %v580, %v579
    %v590 = vpack.c.b16 %v582, %v581
    %599 = vmatprep.subr.bf16.mxu0 0
    %600 = vmatpush1.bf16.msra.mxu0 %v583
    %601 = vmatprep.subr.bf16.mxu0 0
    %602 = vmatpush1.bf16.msra.mxu0 %v584
    %603 = vmatprep.subr.bf16.mxu0 0
    %604 = vmatpush1.bf16.msra.mxu0 %v585
    %605 = vmatprep.subr.bf16.mxu0 0
    %606 = vmatpush1.bf16.msra.mxu0 %v586
    %607 = vmatprep.subr.bf16.mxu0 0
    %608 = vmatpush1.bf16.msra.mxu0 %v587
    %609 = vmatprep.subr.bf16.mxu0 0
    %610 = vmatpush1.bf16.msra.mxu0 %v588
    %611 = vmatprep.subr.bf16.mxu0 0
    %612 = vmatpush1.bf16.msra.mxu0 %v589
    %613 = vmatprep.subr.bf16.mxu0 0
    %614 = vmatpush1.bf16.msra.mxu0 %v590
    %615 = vmatprep.subr.bf16.mxu0 0
    %616 = vmatpush1.bf16.msra.mxu0 0
    %617 = vmatprep.subr.bf16.mxu0 0
    %618 = vmatpush1.bf16.msra.mxu0 0
    %619 = vmatprep.subr.bf16.mxu0 0
    %620 = vmatpush1.bf16.msra.mxu0 0
    %621 = vmatprep.subr.bf16.mxu0 0
    %622 = vmatpush1.bf16.msra.mxu0 0
    %623 = vmatprep.subr.bf16.mxu0 0
    %624 = vmatpush1.bf16.msra.mxu0 0
    %625 = vmatprep.subr.bf16.mxu0 0
    %626 = vmatpush1.bf16.msra.mxu0 0
    %627 = vmatprep.subr.bf16.mxu0 0
    %628 = vmatpush1.bf16.msra.mxu0 0
    %629 = vmatprep.subr.bf16.mxu0 0
    %630 = vmatpush1.bf16.msra.mxu0 0
    %631 = vmatprep.mubr.bf16.mxu0 0
    %632 = vmatmul.mubr.bf16.gmra.mrb[0].mxu0 %v521
    %v633 = vpop.f32.mrb[0].mxu0
    %v634 = vadd.f32 %v550, %v633
    %v635 = vpop.f32.mrb[0].mxu0
    %v636 = vpop.f32.mrb[0].mxu0
    %v637 = vadd.f32 %v550, %v636
    %v638 = vpop.f32.mrb[0].mxu0
    %639 = vmatprep.mubr.bf16.mxu0 0
    %640 = vmatmul.mubr.bf16.gmra.mrb[0].mxu0 %v522
    %v641 = vpop.f32.mrb[0].mxu0
    %v642 = vadd.f32 %v550, %v641
    %v643 = vpop.f32.mrb[0].mxu0
    %v644 = vpop.f32.mrb[0].mxu0
    %v645 = vadd.f32 %v550, %v644
    %v646 = vpop.f32.mrb[0].mxu0
    %647 = vmatprep.mubr.bf16.mxu0 0
    %648 = vmatmul.mubr.bf16.gmra.mrb[0].mxu0 %v523
    %v649 = vpop.f32.mrb[0].mxu0
    %v650 = vadd.f32 %v550, %v649
    %v651 = vpop.f32.mrb[0].mxu0
    %v652 = vpop.f32.mrb[0].mxu0
    %v653 = vadd.f32 %v550, %v652
    %v654 = vpop.f32.mrb[0].mxu0
    %655 = vmatprep.mubr.bf16.mxu0 0
    %656 = vmatmul.mubr.bf16.gmra.mrb[0].mxu0 %v524
    %v657 = vpop.f32.mrb[0].mxu0
    %v658 = vadd.f32 %v550, %v657
    %v659 = vpop.f32.mrb[0].mxu0
    %v660 = vpop.f32.mrb[0].mxu0
    %v661 = vadd.f32 %v550, %v660
    %v662 = vpop.f32.mrb[0].mxu0
    %663 = vmatprep.mubr.bf16.mxu0 0
    %664 = vmatmul.mubr.bf16.gmra.mrb[0].mxu0 %v525
    %v665 = vpop.f32.mrb[0].mxu0
    %v666 = vadd.f32 %v550, %v665
    %v667 = vpop.f32.mrb[0].mxu0
    %v668 = vpop.f32.mrb[0].mxu0
    %v669 = vadd.f32 %v550, %v668
    %v670 = vpop.f32.mrb[0].mxu0
    %671 = vmatprep.mubr.bf16.mxu0 0
    %672 = vmatmul.mubr.bf16.gmra.mrb[0].mxu0 %v526
    %v673 = vpop.f32.mrb[0].mxu0
    %v674 = vadd.f32 %v550, %v673
    %v675 = vpop.f32.mrb[0].mxu0
    %v676 = vpop.f32.mrb[0].mxu0
    %v677 = vadd.f32 %v550, %v676
    %v678 = vpop.f32.mrb[0].mxu0
    %679 = vmatprep.mubr.bf16.mxu0 0
    %680 = vmatmul.mubr.bf16.gmra.mrb[0].mxu0 %v527
    %v681 = vpop.f32.mrb[0].mxu0
    %v682 = vadd.f32 %v550, %v681
    %v683 = vpop.f32.mrb[0].mxu0
    %v684 = vpop.f32.mrb[0].mxu0
    %v685 = vadd.f32 %v550, %v684
    %v686 = vpop.f32.mrb[0].mxu0
    %687 = vmatprep.mubr.bf16.mxu0 0
    %688 = vmatmul.mubr.bf16.gmra.mrb[0].mxu0 %v528
    %v689 = vpop.f32.mrb[0].mxu0
    %v690 = vadd.f32 %v550, %v689
    %v691 = vpop.f32.mrb[0].mxu0
    %v692 = vpop.f32.mrb[0].mxu0
    %v693 = vadd.f32 %v550, %v692
    %v694 = vpop.f32.mrb[0].mxu0
    %695 = vdwg.mxu0
    %696 = vst [vmem:[#allocation10] sm:$0xff] %v634
    %697 = vst [vmem:[#allocation10 + $0x8] sm:$0xff] %v637
    %698 = vst [vmem:[#allocation10 + $0x10] sm:$0xff] %v642
    %699 = vst [vmem:[#allocation10 + $0x18] sm:$0xff] %v645
    %700 = vst [vmem:[#allocation10 + $0x20] sm:$0xff] %v650
    %701 = vst [vmem:[#allocation10 + $0x28] sm:$0xff] %v653
    %702 = vst [vmem:[#allocation10 + $0x30] sm:$0xff] %v658
    %703 = vst [vmem:[#allocation10 + $0x38] sm:$0xff] %v661
    %704 = vst [vmem:[#allocation10 + $0x40] sm:$0xff] %v666
    %705 = vst [vmem:[#allocation10 + $0x48] sm:$0xff] %v669
    %706 = vst [vmem:[#allocation10 + $0x50] sm:$0xff] %v674
    %707 = vst [vmem:[#allocation10 + $0x58] sm:$0xff] %v677
    %708 = vst [vmem:[#allocation10 + $0x60] sm:$0xff] %v682
    %709 = vst [vmem:[#allocation10 + $0x68] sm:$0xff] %v685
    %710 = vst [vmem:[#allocation10 + $0x70] sm:$0xff] %v690
    %711 = vst [vmem:[#allocation10 + $0x78] sm:$0xff] %v693
    // Predicated region
    $region46: #{tpu_custom_call.1} parent=1 // pred_check
      _
    $region47: #{tpu_custom_call.1} parent=1 // pred_check_branch
      %713 = sbr.rel (0) target = $region49
    $region48: #{tpu_custom_call.1} parent=1 // pred_region
      %s715 = ssub.s32 2048, 2048
      %716 = vsyncadd [#allocation4], %s715
      %s717 = sshll.u32 [#allocation10], 4
      %s718 = int_to_ptr.vmem [resolvable:$true] %s717
      %723 = dma.vmem_to_hbm [thread:$0]  %s718, 2048, %s7, [#allocation4], 128, 128, 8
    $region49: #{tpu_custom_call.1} parent=1 // pred_fallthru
      _
    // Predicated region
    $region50: #{tpu_custom_call.1} parent=1 // pred_check
      _
    $region51: #{tpu_custom_call.1} parent=1 // pred_check_branch
      %725 = sbr.rel (0) target = $region53
    $region52: #{tpu_custom_call.1} parent=1 // pred_region
      %726 = dma.done [#allocation4], 2048
    $region53: #{tpu_custom_call.1} parent=1 // pred_fallthru
      _
    %727 = vsyncpa [#allocation3], 1
    %728 = vsyncpa [#allocation6], 1
    %729 = vsyncpa [#allocation9], 1
    %730 = vsyncpa [#allocation4], 1

</llo_original>
